<compile_context>
chip_gen: v6e
topology: v6e:2x2x1
jax: 0.10.0
libtpu: 0.0.40
codegen_flags: <defaults>
</compile_context>

<pallas_src>
import jax
import jax.numpy as jnp
from jax.experimental import pallas as pl
from jax.experimental.pallas import tpu as pltpu


def policy_kernel(x_ref, state_ref, w1_ref, b1_ref, w2_ref, b2_ref,
                  bias_tbl_ref, out_ref):
    tb = x_ref.shape[0]
    sp = bias_tbl_ref.shape[0]

    # ---- policy_net.forward: 2-layer MLP. bf16 MXU inputs, f32 accumulation.
    x_bf = x_ref[...].astype(jnp.bfloat16)                 # in-kernel cast (VPU)
    h = jnp.dot(x_bf, w1_ref[...], preferred_element_type=jnp.float32)
    h = jnp.maximum(h + b1_ref[...], 0.0)

    logits = jnp.dot(h.astype(jnp.bfloat16), w2_ref[...],
                     preferred_element_type=jnp.float32)
    logits = logits + b2_ref[...]                          # action dim 128-lane padded

    # ---- Fused policy_mask gather as a one-hot MXU matmul.
    # state_ids: (tb, 1) int32; one_hot: (tb, SP); bias_tbl: (SP, AP) with
    # 0 for legal actions and -1e32 for illegal / padded lanes.
    state_ids = state_ref[...]                             # (tb, 1) int32
    iota = jax.lax.broadcasted_iota(jnp.int32, (tb, sp), 1)
    one_hot = (iota == state_ids).astype(jnp.bfloat16)
    bias = jnp.dot(one_hot, bias_tbl_ref[...],
                   preferred_element_type=jnp.float32)

    # masked_fill((1 - mask).bool(), -1e32) folded into an additive bias.
    masked = logits + bias

    # ---- Numerically stable softmax over the (padded) action axis.
    # Illegal + padded lanes sit at ~-1e32, so exp(. - m) underflows to 0.
    m = jnp.max(masked, axis=1, keepdims=True)
    e = jnp.exp(masked - m)
    denom = jnp.sum(e, axis=1, keepdims=True)
    inv = pl.reciprocal(denom, approx=True)                # EUP vrcp (free slot)
    inv = inv * (2.0 - denom * inv)                        # Newton step -> ~f32 accuracy
    out_ref[...] = e * inv


def _round_up(v, m):
    return ((v + m - 1) // m) * m


def policy_wrapper_forward(x, w1, b1, w2, b2, policy_mask, state_tensor,
                           *, max_tb=128):
    """Pallas-backed PolicyWrapper.forward.

    x:            [B, D] float32 input
    w1, b1:       [D, H], [1, H]
    w2, b2:       [H, A], [1, A]
    policy_mask:  [S, A] float32 (0/1)
    state_tensor: [B] int32 state ids
    returns:      [B, A] action probabilities (float32)
    """
    B, D = x.shape
    H = w1.shape[1]
    S, A = policy_mask.shape

    # Batch tiling: single full-batch tile for small B (one grid step, no
    # per-step overhead), 128-row MXU-filling tiles (>=2 steps -> v7x megacore)
    # for large B.
    if B <= max_tb:
        tb = _round_up(B, 8)
        BP = tb
    else:
        tb = max_tb
        BP = _round_up(B, tb)

    AP = max(128, _round_up(A, 128))      # lane-dense action dim
    SP = _round_up(S, 16)                 # bf16 sublane-packed contraction dim

    # --- one-time parameter prep (tiny) ---------------------------------
    w1_bf = w1.astype(jnp.bfloat16)
    w2_bf = jnp.zeros((H, AP), jnp.bfloat16).at[:, :A].set(w2.astype(jnp.bfloat16))
    b2p = jnp.zeros((1, AP), jnp.float32).at[:, :A].set(b2)

    # Additive mask-bias table: 0 for legal actions, -1e32 for illegal actions
    # and for padded action lanes / padded state rows.
    bias_tbl = jnp.full((SP, AP), -1e32, jnp.float32)
    bias_tbl = bias_tbl.at[:S, :A].set(
        jnp.where(policy_mask != 0.0, 0.0, -1e32))
    bias_tbl = bias_tbl.astype(jnp.bfloat16)

    # --- per-call activations: avoid extra HBM passes when already aligned --
    if BP != B:
        xp = jnp.zeros((BP, D), x.dtype).at[:B].set(x)
        stp = jnp.zeros((BP,), jnp.int32).at[:B].set(state_tensor)
    else:
        xp = x
        stp = state_tensor
    stp = stp.reshape(BP, 1).astype(jnp.int32)   # (BP, 1) for in-kernel one-hot

    grid = (BP // tb,)

    out = pl.pallas_call(
        policy_kernel,
        out_shape=jax.ShapeDtypeStruct((BP, AP), jnp.float32),
        grid_spec=pltpu.PrefetchScalarGridSpec(
            num_scalar_prefetch=0,
            grid=grid,
            in_specs=[
                pl.BlockSpec((tb, D), lambda i: (i, 0)),     # x tile (pipelined)
                pl.BlockSpec((tb, 1), lambda i: (i, 0)),     # state ids tile
                pl.BlockSpec((D, H), lambda i: (0, 0)),      # w1 (VMEM-resident)
                pl.BlockSpec((1, H), lambda i: (0, 0)),      # b1
                pl.BlockSpec((H, AP), lambda i: (0, 0)),     # w2 (VMEM-resident)
                pl.BlockSpec((1, AP), lambda i: (0, 0)),     # b2
                pl.BlockSpec((SP, AP), lambda i: (0, 0)),    # additive mask-bias table
            ],
            out_specs=pl.BlockSpec((tb, AP), lambda i: (i, 0)),
        ),
        compiler_params=pltpu.CompilerParams(
            dimension_semantics=("parallel",),    # batch axis: megacore-shardable
            vmem_limit_bytes=32 * 1024 * 1024,    # safe on v5e/v6e (128 MiB) and v7x (64 MiB)
        ),
    )(xp, stp, w1_bf, b1, w2_bf, b2p, bias_tbl)

    # Note: for downstream consumers that accept the 128-lane-padded layout,
    # return `out` directly to skip this extra HBM pass.
    return out[:B, :A]


def reference_forward(x, w1, b1, w2, b2, policy_mask, state_tensor):
    # Matches the kernel's numerics: bf16 MXU inputs, f32 accumulation/softmax.
    xb, w1b, w2b = (t.astype(jnp.bfloat16) for t in (x, w1, w2))
    h = jnp.maximum(jnp.dot(xb, w1b, preferred_element_type=jnp.float32) + b1, 0.0)
    logits = jnp.dot(h.astype(jnp.bfloat16), w2b,
                     preferred_element_type=jnp.float32) + b2
    mask = policy_mask[state_tensor]
    logits = jnp.where(mask != 0.0, logits, -1e32)
    return jax.nn.softmax(logits, axis=1)


if __name__ == "__main__":
    # Small shapes consistent with the forward pass (policy MLP + mask table).
    B, D, H, A, S = 32, 32, 128, 16, 10

    key = jax.random.PRNGKey(0)
    k_x, k_w1, k_b1, k_w2, k_b2, k_mask, k_state = jax.random.split(key, 7)

    x = jax.random.normal(k_x, (B, D), dtype=jnp.float32)

    # Deterministic synthetic policy_net parameters (2-layer MLP).
    w1 = jax.random.normal(k_w1, (D, H), dtype=jnp.float32) * (1.0 / jnp.sqrt(D))
    b1 = jax.random.normal(k_b1, (1, H), dtype=jnp.float32) * 0.01
    w2 = jax.random.normal(k_w2, (H, A), dtype=jnp.float32) * (1.0 / jnp.sqrt(H))
    b2 = jax.random.normal(k_b2, (1, A), dtype=jnp.float32) * 0.01

    # policy_mask[S, A] in {0, 1}; force action 0 always legal so every row has
    # at least one unmasked logit. (An all-zero mask row would — like the
    # original PyTorch -1e32 masked_fill — degenerate to a uniform softmax;
    # with the 128-lane padding that uniform would spread over AP instead of A.)
    policy_mask = (jax.random.uniform(k_mask, (S, A)) > 0.5).astype(jnp.float32)
    policy_mask = policy_mask.at[:, 0].set(1.0)

    state_tensor = jax.random.randint(k_state, (B,), 0, S, dtype=jnp.int32)

    probs = policy_wrapper_forward(x, w1, b1, w2, b2, policy_mask, state_tensor)
    probs = jax.block_until_ready(probs)

    ref = reference_forward(x, w1, b1, w2, b2, policy_mask, state_tensor)
    assert probs.shape == (B, A)
    assert jnp.allclose(probs, ref, atol=1e-4, rtol=1e-4)
    # rows sum to 1 and illegal actions get (numerically) zero probability
    assert jnp.allclose(jnp.sum(probs, axis=1), 1.0, atol=1e-4)
    assert jnp.all(jnp.where(policy_mask[state_tensor] == 0.0, probs, 0.0) < 1e-6)

    print("KERNEL_OK")
</pallas_src>

<mosaic_0001>
module attributes {stable_mosaic.version = 11 : i64} {
  func.func @policy_kernel(%arg0: i32, %arg1: memref<32x32xf32, #tpu.memory_space<vmem>>, %arg2: memref<32x1xi32, #tpu.memory_space<vmem>>, %arg3: memref<32x128xbf16, #tpu.memory_space<vmem>>, %arg4: memref<1x128xf32, #tpu.memory_space<vmem>>, %arg5: memref<128x128xbf16, #tpu.memory_space<vmem>>, %arg6: memref<1x128xf32, #tpu.memory_space<vmem>>, %arg7: memref<16x128xbf16, #tpu.memory_space<vmem>>, %arg8: memref<32x128xf32, #tpu.memory_space<vmem>>) attributes {dimension_semantics = [#tpu.dimension_semantics<parallel>], iteration_bounds = array<i64: 1>, scalar_prefetch = 0 : i64, scratch_operands = 0 : i64, tpu.core_type = #tpu.core_type<tc>, window_params = [{transform_indices = @transform_0, window_bounds = array<i64: 32, 32>}, {transform_indices = @transform_1, window_bounds = array<i64: 32, 1>}, {pipeline_mode = #tpu.pipeline_mode<synchronous>, transform_indices = @transform_2, window_bounds = array<i64: 32, 128>}, {pipeline_mode = #tpu.pipeline_mode<synchronous>, transform_indices = @transform_3, window_bounds = array<i64: 1, 128>}, {pipeline_mode = #tpu.pipeline_mode<synchronous>, transform_indices = @transform_4, window_bounds = array<i64: 128, 128>}, {pipeline_mode = #tpu.pipeline_mode<synchronous>, transform_indices = @transform_5, window_bounds = array<i64: 1, 128>}, {pipeline_mode = #tpu.pipeline_mode<synchronous>, transform_indices = @transform_6, window_bounds = array<i64: 16, 128>}, {transform_indices = @transform_7, window_bounds = array<i64: 32, 128>}]} {
    %c0 = arith.constant 0 : index
    %c0_0 = arith.constant 0 : index
    %0 = vector.load %arg1[%c0, %c0_0] : memref<32x32xf32, #tpu.memory_space<vmem>>, vector<32x32xf32>
    %1 = arith.truncf %0 : vector<32x32xf32> to vector<32x32xbf16>
    %c0_1 = arith.constant 0 : index
    %c0_2 = arith.constant 0 : index
    %2 = vector.load %arg3[%c0_1, %c0_2] : memref<32x128xbf16, #tpu.memory_space<vmem>>, vector<32x128xbf16>
    %cst = arith.constant dense<0.000000e+00> : vector<32x128xf32>
    %3 = tpu.matmul %1, %2, %cst {dimension_numbers = #tpu.dot_dimension_numbers<[1], [0], [0], [1], [0, 0, 1, 1], [], []>} : vector<32x32xbf16>, vector<32x128xbf16>, vector<32x128xf32> -> vector<32x128xf32>
    %c0_3 = arith.constant 0 : index
    %c0_4 = arith.constant 0 : index
    %4 = vector.load %arg4[%c0_3, %c0_4] : memref<1x128xf32, #tpu.memory_space<vmem>>, vector<1x128xf32>
    %5 = vector.broadcast %4 : vector<1x128xf32> to vector<32x128xf32>
    %6 = arith.addf %3, %5 : vector<32x128xf32>
    %cst_5 = arith.constant 0.000000e+00 : f32
    %7 = vector.broadcast %cst_5 : f32 to vector<32x128xf32>
    %8 = arith.maximumf %6, %7 : vector<32x128xf32>
    %9 = arith.truncf %8 : vector<32x128xf32> to vector<32x128xbf16>
    %c0_6 = arith.constant 0 : index
    %c0_7 = arith.constant 0 : index
    %10 = vector.load %arg5[%c0_6, %c0_7] : memref<128x128xbf16, #tpu.memory_space<vmem>>, vector<128x128xbf16>
    %cst_8 = arith.constant dense<0.000000e+00> : vector<32x128xf32>
    %11 = tpu.matmul %9, %10, %cst_8 {dimension_numbers = #tpu.dot_dimension_numbers<[1], [0], [0], [1], [0, 0, 1, 1], [], []>} : vector<32x128xbf16>, vector<128x128xbf16>, vector<32x128xf32> -> vector<32x128xf32>
    %c0_9 = arith.constant 0 : index
    %c0_10 = arith.constant 0 : index
    %12 = vector.load %arg6[%c0_9, %c0_10] : memref<1x128xf32, #tpu.memory_space<vmem>>, vector<1x128xf32>
    %13 = vector.broadcast %12 : vector<1x128xf32> to vector<32x128xf32>
    %14 = arith.addf %11, %13 : vector<32x128xf32>
    %c0_11 = arith.constant 0 : index
    %c0_12 = arith.constant 0 : index
    %15 = vector.load %arg2[%c0_11, %c0_12] : memref<32x1xi32, #tpu.memory_space<vmem>>, vector<32x1xi32>
    %16 = tpu.iota {dimensions = array<i32: 1>} : vector<32x16xi32>
    %17 = vector.broadcast %15 : vector<32x1xi32> to vector<32x16xi32>
    %18 = arith.cmpi eq, %16, %17 : vector<32x16xi32>
    %19 = arith.extui %18 : vector<32x16xi1> to vector<32x16xi32>
    %20 = arith.sitofp %19 : vector<32x16xi32> to vector<32x16xf32>
    %21 = arith.truncf %20 : vector<32x16xf32> to vector<32x16xbf16>
    %c0_13 = arith.constant 0 : index
    %c0_14 = arith.constant 0 : index
    %22 = vector.load %arg7[%c0_13, %c0_14] : memref<16x128xbf16, #tpu.memory_space<vmem>>, vector<16x128xbf16>
    %cst_15 = arith.constant dense<0.000000e+00> : vector<32x128xf32>
    %23 = tpu.matmul %21, %22, %cst_15 {dimension_numbers = #tpu.dot_dimension_numbers<[1], [0], [0], [1], [0, 0, 1, 1], [], []>} : vector<32x16xbf16>, vector<16x128xbf16>, vector<32x128xf32> -> vector<32x128xf32>
    %24 = arith.addf %14, %23 : vector<32x128xf32>
    %cst_16 = arith.constant dense<0xFF800000> : vector<32xf32>
    %25 = vector.multi_reduction <maximumf>, %24, %cst_16 [1] : vector<32x128xf32> to vector<32xf32>
    %26 = vector.shape_cast %25 : vector<32xf32> to vector<32x1xf32>
    %27 = vector.broadcast %26 : vector<32x1xf32> to vector<32x128xf32>
    %28 = arith.subf %24, %27 : vector<32x128xf32>
    %29 = math.exp %28 : vector<32x128xf32>
    %cst_17 = arith.constant dense<0.000000e+00> : vector<32xf32>
    %30 = vector.multi_reduction <add>, %29, %cst_17 [1] : vector<32x128xf32> to vector<32xf32>
    %31 = vector.shape_cast %30 : vector<32xf32> to vector<32x1xf32>
    %32 = tpu.reciprocal %31 {approx = true} : vector<32x1xf32> -> vector<32x1xf32>
    %33 = arith.mulf %31, %32 : vector<32x1xf32>
    %cst_18 = arith.constant 2.000000e+00 : f32
    %34 = vector.broadcast %cst_18 : f32 to vector<32x1xf32>
    %35 = arith.subf %34, %33 : vector<32x1xf32>
    %36 = arith.mulf %32, %35 : vector<32x1xf32>
    %37 = vector.broadcast %36 : vector<32x1xf32> to vector<32x128xf32>
    %38 = arith.mulf %29, %37 : vector<32x128xf32>
    %c0_19 = arith.constant 0 : index
    %c0_20 = arith.constant 0 : index
    %39 = vector.load %arg8[%c0_19, %c0_20] : memref<32x128xf32, #tpu.memory_space<vmem>>, vector<32x128xf32>
    tpu.vector_store %arg8[%c0_19, %c0_20], %38 {strides = array<i32>} : memref<32x128xf32, #tpu.memory_space<vmem>>, vector<32x128xf32>,
    return
  }
  func.func @transform_0(%arg0: i32) -> (i32, i32) {
    %c0_i32 = arith.constant 0 : i32
    %c0_i32_0 = arith.constant 0 : i32
    return %arg0, %c0_i32 : i32, i32
  }
  func.func @transform_1(%arg0: i32) -> (i32, i32) {
    %c0_i32 = arith.constant 0 : i32
    %c0_i32_0 = arith.constant 0 : i32
    return %arg0, %c0_i32 : i32, i32
  }
  func.func @transform_2(%arg0: i32) -> (i32, i32) {
    %c0_i32 = arith.constant 0 : i32
    %c0_i32_0 = arith.constant 0 : i32
    %c0_i32_1 = arith.constant 0 : i32
    return %c0_i32, %c0_i32_0 : i32, i32
  }
  func.func @transform_3(%arg0: i32) -> (i32, i32) {
    %c0_i32 = arith.constant 0 : i32
    %c0_i32_0 = arith.constant 0 : i32
    %c0_i32_1 = arith.constant 0 : i32
    return %c0_i32, %c0_i32_0 : i32, i32
  }
  func.func @transform_4(%arg0: i32) -> (i32, i32) {
    %c0_i32 = arith.constant 0 : i32
    %c0_i32_0 = arith.constant 0 : i32
    %c0_i32_1 = arith.constant 0 : i32
    return %c0_i32, %c0_i32_0 : i32, i32
  }
  func.func @transform_5(%arg0: i32) -> (i32, i32) {
    %c0_i32 = arith.constant 0 : i32
    %c0_i32_0 = arith.constant 0 : i32
    %c0_i32_1 = arith.constant 0 : i32
    return %c0_i32, %c0_i32_0 : i32, i32
  }
  func.func @transform_6(%arg0: i32) -> (i32, i32) {
    %c0_i32 = arith.constant 0 : i32
    %c0_i32_0 = arith.constant 0 : i32
    %c0_i32_1 = arith.constant 0 : i32
    return %c0_i32, %c0_i32_0 : i32, i32
  }
  func.func @transform_7(%arg0: i32) -> (i32, i32) {
    %c0_i32 = arith.constant 0 : i32
    %c0_i32_0 = arith.constant 0 : i32
    return %arg0, %c0_i32 : i32, i32
  }
}

</mosaic_0001>

<llo_original>
// kernel: tpu_custom_call.1
$region0: #{tpu_custom_call.1}
  #allocation0 [shape = 'u32[]', space=smem, size = 0x4, offset = 0x4, fixed_abs, tag = 'smem constant byte address 0x4 - core index']
  #allocation1 [shape = 'u32[144,128]{1,0:T(1,128)}', space=vmem, size = 0x12000, scoped, tag = 'internal scratch']
  %s0 = inlined_call_operand.vmem [shape: f32[32,32], index: 0, kind: input, shape index: {}]
  %s1 = inlined_call_operand.vmem [shape: s32[32,1], index: 1, kind: input, shape index: {}]
  %s2 = inlined_call_operand.hbm [shape: bf16[32,128], index: 2, kind: input, shape index: {}]
  %s3 = inlined_call_operand.hbm [shape: f32[1,128], index: 3, kind: input, shape index: {}]
  %s4 = inlined_call_operand.hbm [shape: bf16[128,128], index: 4, kind: input, shape index: {}]
  %s5 = inlined_call_operand.vmem [shape: f32[1,128], index: 5, kind: input, shape index: {}]
  %s6 = inlined_call_operand.vmem [shape: bf16[16,128], index: 6, kind: input, shape index: {}]
  %s7 = inlined_call_operand.hbm [shape: f32[32,128], index: 7, kind: output, shape index: {}]
  %s8 = sld [smem:[#allocation0]]
  $region50: #{tpu_custom_call.1} parent=0
    _
  %s10 = ssub.s32 1, %s8
  %s11 = scalar_select 0, %s10, %s8
  $region1: #{tpu_custom_call.1} parent=0
    #allocation2 [shape = 'u8[8192]{0}', space=vmem, size = 0x2000, scoped, tag = 'input window, operand 2, single buffered']
    #allocation3 [shape = 's32[1]{0}', space=sflag, size = 0x4, scoped, tag = 'scoped memory for tpu_custom_call.1']
    #allocation4 [shape = 's32[1]{0}', space=sflag, size = 0x4, scoped, tag = 'scoped memory for tpu_custom_call.1']
    #allocation5 [shape = 'u8[512]{0}', space=vmem, size = 0x400, scoped, tag = 'input window, operand 3, single buffered']
    #allocation6 [shape = 's32[1]{0}', space=sflag, size = 0x4, scoped, tag = 'scoped memory for tpu_custom_call.1']
    #allocation7 [shape = 'u8[32768]{0}', space=vmem, size = 0x8000, scoped, tag = 'input window, operand 4, single buffered']
    #allocation8 [shape = 'u8[16384]{0}', space=vmem, size = 0x4000, scoped, tag = 'output window, operand 0, single buffered']
    %12 = vsyncpa [#allocation3], 0
    %13 = vsyncpa [#allocation6], 0
    %14 = vsyncpa [#allocation4], 0
    // Predicated region
    $region2: #{tpu_custom_call.1} parent=1 // pred_check
      _
    $region3: #{tpu_custom_call.1} parent=1 // pred_check_branch
      %16 = sbr.rel (0) target = $region5
    $region4: #{tpu_custom_call.1} parent=1 // pred_region
      _
    $region5: #{tpu_custom_call.1} parent=1 // pred_fallthru
      _
    // Predicated region
    $region6: #{tpu_custom_call.1} parent=1 // pred_check
      _
    $region7: #{tpu_custom_call.1} parent=1 // pred_check_branch
      %18 = sbr.rel (0) target = $region9
    $region8: #{tpu_custom_call.1} parent=1 // pred_region
      _
    $region9: #{tpu_custom_call.1} parent=1 // pred_fallthru
      _
    // Predicated region
    $region10: #{tpu_custom_call.1} parent=1 // pred_check
      _
    $region11: #{tpu_custom_call.1} parent=1 // pred_check_branch
      %20 = sbr.rel (0) target = $region13
    $region12: #{tpu_custom_call.1} parent=1 // pred_region
      %s22 = ssub.s32 256, 256
      %23 = vsyncadd [#allocation3], %s22
      %s24 = sshll.u32 [#allocation2], 4
      %s25 = int_to_ptr.vmem [resolvable:$true] %s24
      %30 = dma.hbm_to_vmem [thread:$0]  %s2, 256, %s25, [#allocation3], 64, 64, 4
    $region13: #{tpu_custom_call.1} parent=1 // pred_fallthru
      _
    // Predicated region
    $region14: #{tpu_custom_call.1} parent=1 // pred_check
      _
    $region15: #{tpu_custom_call.1} parent=1 // pred_check_branch
      %32 = sbr.rel (0) target = $region17
    $region16: #{tpu_custom_call.1} parent=1 // pred_region
      %s34 = ssub.s32 16, 16
      %35 = vsyncadd [#allocation6], %s34
      %s37 = sshll.u32 [#allocation5], 4
      %s38 = int_to_ptr.vmem [resolvable:$true] %s37
      %40 = dma.hbm_to_vmem [thread:$0]  %s3, 16, %s38, [#allocation6]
    $region17: #{tpu_custom_call.1} parent=1 // pred_fallthru
      _
    // Predicated region
    $region18: #{tpu_custom_call.1} parent=1 // pred_check
      _
    $region19: #{tpu_custom_call.1} parent=1 // pred_check_branch
      %42 = sbr.rel (0) target = $region21
    $region20: #{tpu_custom_call.1} parent=1 // pred_region
      %s44 = ssub.s32 1024, 1024
      %45 = vsyncadd [#allocation6], %s44
      %s46 = sshll.u32 [#allocation7], 4
      %s47 = int_to_ptr.vmem [resolvable:$true] %s46
      %52 = dma.hbm_to_vmem [thread:$0]  %s4, 1024, %s47, [#allocation6], 64, 64, 4
    $region21: #{tpu_custom_call.1} parent=1 // pred_fallthru
      _
    // Predicated region
    $region22: #{tpu_custom_call.1} parent=1 // pred_check
      _
    $region23: #{tpu_custom_call.1} parent=1 // pred_check_branch
      %54 = sbr.rel (0) target = $region25
    $region24: #{tpu_custom_call.1} parent=1 // pred_region
      _
    $region25: #{tpu_custom_call.1} parent=1 // pred_fallthru
      _
    // Predicated region
    $region26: #{tpu_custom_call.1} parent=1 // pred_check
      _
    $region27: #{tpu_custom_call.1} parent=1 // pred_check_branch
      %56 = sbr.rel (0) target = $region29
    $region28: #{tpu_custom_call.1} parent=1 // pred_region
      _
    $region29: #{tpu_custom_call.1} parent=1 // pred_fallthru
      _
    // Predicated region
    $region30: #{tpu_custom_call.1} parent=1 // pred_check
      _
    $region31: #{tpu_custom_call.1} parent=1 // pred_check_branch
      %58 = sbr.rel (0) target = $region33
    $region32: #{tpu_custom_call.1} parent=1 // pred_region
      %59 = dma.done [#allocation3], 256
    $region33: #{tpu_custom_call.1} parent=1 // pred_fallthru
      _
    // Predicated region
    $region34: #{tpu_custom_call.1} parent=1 // pred_check
      _
    $region35: #{tpu_custom_call.1} parent=1 // pred_check_branch
      %61 = sbr.rel (0) target = $region37
    $region36: #{tpu_custom_call.1} parent=1 // pred_region
      %62 = dma.done [#allocation6], 16
    $region37: #{tpu_custom_call.1} parent=1 // pred_fallthru
      _
    // Predicated region
    $region38: #{tpu_custom_call.1} parent=1 // pred_check
      _
    $region39: #{tpu_custom_call.1} parent=1 // pred_check_branch
      %64 = sbr.rel (0) target = $region41
    $region40: #{tpu_custom_call.1} parent=1 // pred_region
      %65 = dma.done [#allocation6], 1024
    $region41: #{tpu_custom_call.1} parent=1 // pred_fallthru
      _
    %v67 = vld [vmem:[%s0] sm:$0xff]
    %v68 = vld [vmem:[%s0 + $0x8] sm:$0xff]
    %v69 = vld [vmem:[%s0 + $0x10] sm:$0xff]
    %v70 = vld [vmem:[%s0 + $0x18] sm:$0xff]
    %v71 = vpack.c.bf16 %v68, %v67
    %v72 = vpack.c.bf16 %v70, %v69
    %v73 = vld [vmem:[#allocation2] sm:$0xf]
    %v74 = vld [vmem:[#allocation2 + $0x4] sm:$0xf]
    %v75 = vld [vmem:[#allocation2 + $0x8] sm:$0xf]
    %v76 = vld [vmem:[#allocation2 + $0xc] sm:$0xf]
    %v77 = vld [vmem:[#allocation5] sm:$0x1]
    %v79 = vlaneseq
    %v80 = vshrl.u32 %v79, 7
    %v81 = vsub.s32 0, %v80
    %v82 = vrot.slane %v77, %v81
    %v88 = vunpack.c.l.b16 %v73
    %v89 = vunpack.c.l.b16 %v74
    %v90 = vunpack.c.l.b16 %v75
    %v91 = vunpack.c.l.b16 %v76
    %v92 = vpack.c.b16 %v89, %v88
    %v93 = vpack.c.b16 %v91, %v90
    %vm96 = vcmask 261120
    %v98 = vsel %vm96, %v71, 0
    %v101 = vsel %vm96, %v72, 0
    %103 = vmatprep.subr.bf16.mxu0 0
    %104 = vmatpush1.bf16.msra.mxu0 0
    %105 = vmatprep.subr.bf16.mxu0 0
    %106 = vmatpush1.bf16.msra.mxu0 0
    %107 = vmatprep.subr.bf16.mxu0 0
    %108 = vmatpush1.bf16.msra.mxu0 0
    %109 = vmatprep.subr.bf16.mxu0 0
    %110 = vmatpush1.bf16.msra.mxu0 0
    %111 = vmatprep.subr.bf16.mxu0 0
    %112 = vmatpush1.bf16.msra.mxu0 0
    %113 = vmatprep.subr.bf16.mxu0 0
    %114 = vmatpush1.bf16.msra.mxu0 0
    %115 = vmatprep.subr.bf16.mxu0 0
    %116 = vmatpush1.bf16.msra.mxu0 %v93
    %117 = vmatprep.subr.bf16.mxu0 0
    %118 = vmatpush1.bf16.msra.mxu0 %v92
    %119 = vmatprep.subr.bf16.mxu0 0
    %120 = vmatpush2.bf16.msra.mxu0 0
    %121 = vmatprep.subr.bf16.mxu0 0
    %122 = vmatpush2.bf16.msra.mxu0 0
    %123 = vmatprep.subr.bf16.mxu0 0
    %124 = vmatpush2.bf16.msra.mxu0 0
    %125 = vmatprep.subr.bf16.mxu0 0
    %126 = vmatpush2.bf16.msra.mxu0 0
    %127 = vmatprep.subr.bf16.mxu0 0
    %128 = vmatpush2.bf16.msra.mxu0 0
    %129 = vmatprep.subr.bf16.mxu0 0
    %130 = vmatpush2.bf16.msra.mxu0 0
    %131 = vmatprep.subr.bf16.mxu0 0
    %132 = vmatpush2.bf16.msra.mxu0 0
    %133 = vmatprep.subr.bf16.mxu0 0
    %134 = vmatpush2.bf16.msra.mxu0 0
    %135 = vmatprep.mubr.bf16.mxu0 0
    %136 = vmatmul.mubr.bf16.gmra.mxu0 %v98
    %v137 = vpop.f32.mrf.mxu0
    %v138 = vadd.f32 %v82, %v137
    %v139 = vpop.f32.mrf.mxu0
    %v140 = vpop.f32.mrf.mxu0
    %v141 = vadd.f32 %v82, %v140
    %v142 = vpop.f32.mrf.mxu0
    %143 = vmatprep.mubr.bf16.mxu0 0
    %144 = vmatmul.mubr.bf16.gmra.mxu0 %v101
    %v145 = vpop.f32.mrf.mxu0
    %v146 = vadd.f32 %v82, %v145
    %v147 = vpop.f32.mrf.mxu0
    %v148 = vpop.f32.mrf.mxu0
    %v149 = vadd.f32 %v82, %v148
    %v150 = vpop.f32.mrf.mxu0
    %151 = vdwg.mxu0
    %v152 = vmax.f32 %v138, 0.0
    %v153 = vmax.f32 %v141, 0.0
    %v154 = vmax.f32 %v146, 0.0
    %v155 = vmax.f32 %v149, 0.0
    %v156 = vpack.c.bf16 %v153, %v152
    %v157 = vpack.c.bf16 %v155, %v154
    %v158 = vld [vmem:[#allocation7] sm:$0xf]
    %v159 = vld [vmem:[#allocation7 + $0x4] sm:$0xf]
    %v160 = vld [vmem:[#allocation7 + $0x8] sm:$0xf]
    %v161 = vld [vmem:[#allocation7 + $0xc] sm:$0xf]
    %v162 = vld [vmem:[#allocation7 + $0x10] sm:$0xf]
    %v163 = vld [vmem:[#allocation7 + $0x14] sm:$0xf]
    %v164 = vld [vmem:[#allocation7 + $0x18] sm:$0xf]
    %v165 = vld [vmem:[#allocation7 + $0x1c] sm:$0xf]
    %v166 = vld [vmem:[#allocation7 + $0x20] sm:$0xf]
    %v167 = vld [vmem:[#allocation7 + $0x24] sm:$0xf]
    %v168 = vld [vmem:[#allocation7 + $0x28] sm:$0xf]
    %v169 = vld [vmem:[#allocation7 + $0x2c] sm:$0xf]
    %v170 = vld [vmem:[#allocation7 + $0x30] sm:$0xf]
    %v171 = vld [vmem:[#allocation7 + $0x34] sm:$0xf]
    %v172 = vld [vmem:[#allocation7 + $0x38] sm:$0xf]
    %v173 = vld [vmem:[#allocation7 + $0x3c] sm:$0xf]
    %v174 = vld [vmem:[%s5] sm:$0x1]
    %v176 = vlaneseq
    %v177 = vshrl.u32 %v176, 7
    %v178 = vsub.s32 0, %v177
    %v179 = vrot.slane %v174, %v178
    %v197 = vunpack.c.l.b16 %v158
    %v198 = vunpack.c.l.b16 %v159
    %v199 = vunpack.c.l.b16 %v160
    %v200 = vunpack.c.l.b16 %v161
    %v201 = vunpack.c.l.b16 %v162
    %v202 = vunpack.c.l.b16 %v163
    %v203 = vunpack.c.l.b16 %v164
    %v204 = vunpack.c.l.b16 %v165
    %v205 = vunpack.c.l.b16 %v166
    %v206 = vunpack.c.l.b16 %v167
    %v207 = vunpack.c.l.b16 %v168
    %v208 = vunpack.c.l.b16 %v169
    %v209 = vunpack.c.l.b16 %v170
    %v210 = vunpack.c.l.b16 %v171
    %v211 = vunpack.c.l.b16 %v172
    %v212 = vunpack.c.l.b16 %v173
    %v213 = vpack.c.b16 %v198, %v197
    %v214 = vpack.c.b16 %v200, %v199
    %v215 = vpack.c.b16 %v202, %v201
    %v216 = vpack.c.b16 %v204, %v203
    %v217 = vpack.c.b16 %v206, %v205
    %v218 = vpack.c.b16 %v208, %v207
    %v219 = vpack.c.b16 %v210, %v209
    %v220 = vpack.c.b16 %v212, %v211
    %229 = vmatprep.subr.bf16.mxu0 0
    %230 = vmatpush1.bf16.msra.mxu0 %v220
    %231 = vmatprep.subr.bf16.mxu0 0
    %232 = vmatpush1.bf16.msra.mxu0 %v219
    %233 = vmatprep.subr.bf16.mxu0 0
    %234 = vmatpush1.bf16.msra.mxu0 %v218
    %235 = vmatprep.subr.bf16.mxu0 0
    %236 = vmatpush1.bf16.msra.mxu0 %v217
    %237 = vmatprep.subr.bf16.mxu0 0
    %238 = vmatpush1.bf16.msra.mxu0 %v216
    %239 = vmatprep.subr.bf16.mxu0 0
    %240 = vmatpush1.bf16.msra.mxu0 %v215
    %241 = vmatprep.subr.bf16.mxu0 0
    %242 = vmatpush1.bf16.msra.mxu0 %v214
    %243 = vmatprep.subr.bf16.mxu0 0
    %244 = vmatpush1.bf16.msra.mxu0 %v213
    %245 = vmatprep.subr.bf16.mxu0 0
    %246 = vmatpush2.bf16.msra.mxu0 0
    %247 = vmatprep.subr.bf16.mxu0 0
    %248 = vmatpush2.bf16.msra.mxu0 0
    %249 = vmatprep.subr.bf16.mxu0 0
    %250 = vmatpush2.bf16.msra.mxu0 0
    %251 = vmatprep.subr.bf16.mxu0 0
    %252 = vmatpush2.bf16.msra.mxu0 0
    %253 = vmatprep.subr.bf16.mxu0 0
    %254 = vmatpush2.bf16.msra.mxu0 0
    %255 = vmatprep.subr.bf16.mxu0 0
    %256 = vmatpush2.bf16.msra.mxu0 0
    %257 = vmatprep.subr.bf16.mxu0 0
    %258 = vmatpush2.bf16.msra.mxu0 0
    %259 = vmatprep.subr.bf16.mxu0 0
    %260 = vmatpush2.bf16.msra.mxu0 0
    %261 = vmatprep.mubr.bf16.mxu0 0
    %262 = vmatmul.mubr.bf16.gmra.mxu0 %v156
    %v263 = vpop.f32.mrf.mxu0
    %v264 = vadd.f32 %v179, %v263
    %v265 = vpop.f32.mrf.mxu0
    %v266 = vpop.f32.mrf.mxu0
    %v267 = vadd.f32 %v179, %v266
    %v268 = vpop.f32.mrf.mxu0
    %269 = vmatprep.mubr.bf16.mxu0 0
    %270 = vmatmul.mubr.bf16.gmra.mxu0 %v157
    %v271 = vpop.f32.mrf.mxu0
    %v272 = vadd.f32 %v179, %v271
    %v273 = vpop.f32.mrf.mxu0
    %v274 = vpop.f32.mrf.mxu0
    %v275 = vadd.f32 %v179, %v274
    %v276 = vpop.f32.mrf.mxu0
    %277 = vdwg.mxu0
    %v278 = vld [vmem:[%s1] sm:$0xff]
    %v279 = vld [vmem:[%s1 + $0x8] sm:$0xff]
    %v280 = vld [vmem:[%s1 + $0x10] sm:$0xff]
    %v281 = vld [vmem:[%s1 + $0x18] sm:$0xff]
    %v282 = vlaneseq
    %v283 = vand.u32 %v282, 127
    %284 = vset.pattern.permute.xlu0 0
    %285 = vperm.xlu0 %284, %v278
    %v286 = vpop.permute.xlu0 %285
    %287 = vset.pattern.permute.xlu0 0
    %288 = vperm.xlu0 %287, %v279
    %v289 = vpop.permute.xlu0 %288
    %290 = vset.pattern.permute.xlu0 0
    %291 = vperm.xlu0 %290, %v280
    %v292 = vpop.permute.xlu0 %291
    %293 = vset.pattern.permute.xlu0 0
    %294 = vperm.xlu0 %293, %v281
    %v295 = vpop.permute.xlu0 %294
    %vm296 = vcmp.eq.s32.totalorder %v283, %v286
    %vm297 = vcmp.eq.s32.totalorder %v283, %v289
    %vm298 = vcmp.eq.s32.totalorder %v283, %v292
    %vm299 = vcmp.eq.s32.totalorder %v283, %v295
    %v300 = vsel %vm296, 1, 0
    %v301 = vsel %vm297, 1, 0
    %v302 = vsel %vm298, 1, 0
    %v303 = vsel %vm299, 1, 0
    %v304 = vcvt.s32.f32 %v300
    %v305 = vcvt.s32.f32 %v301
    %v306 = vcvt.s32.f32 %v302
    %v307 = vcvt.s32.f32 %v303
    %v308 = vpack.c.bf16 %v305, %v304
    %v309 = vpack.c.bf16 %v307, %v306
    %v310 = vld [vmem:[%s6] sm:$0xf]
    %v311 = vld [vmem:[%s6 + $0x4] sm:$0xf]
    %v314 = vunpack.c.l.b16 %v310
    %v315 = vunpack.c.l.b16 %v311
    %v316 = vpack.c.b16 %v315, %v314
    %vm318 = vcmask 130048
    %v320 = vsel %vm318, %v308, 0
    %v323 = vsel %vm318, %v309, 0
    %325 = vmatprep.subr.bf16.mxu0 0
    %326 = vmatpush1.bf16.msra.mxu0 0
    %327 = vmatprep.subr.bf16.mxu0 0
    %328 = vmatpush1.bf16.msra.mxu0 0
    %329 = vmatprep.subr.bf16.mxu0 0
    %330 = vmatpush1.bf16.msra.mxu0 0
    %331 = vmatprep.subr.bf16.mxu0 0
    %332 = vmatpush1.bf16.msra.mxu0 0
    %333 = vmatprep.subr.bf16.mxu0 0
    %334 = vmatpush1.bf16.msra.mxu0 0
    %335 = vmatprep.subr.bf16.mxu0 0
    %336 = vmatpush1.bf16.msra.mxu0 0
    %337 = vmatprep.subr.bf16.mxu0 0
    %338 = vmatpush1.bf16.msra.mxu0 0
    %339 = vmatprep.subr.bf16.mxu0 0
    %340 = vmatpush1.bf16.msra.mxu0 %v316
    %341 = vmatprep.subr.bf16.mxu0 0
    %342 = vmatpush2.bf16.msra.mxu0 0
    %343 = vmatprep.subr.bf16.mxu0 0
    %344 = vmatpush2.bf16.msra.mxu0 0
    %345 = vmatprep.subr.bf16.mxu0 0
    %346 = vmatpush2.bf16.msra.mxu0 0
    %347 = vmatprep.subr.bf16.mxu0 0
    %348 = vmatpush2.bf16.msra.mxu0 0
    %349 = vmatprep.subr.bf16.mxu0 0
    %350 = vmatpush2.bf16.msra.mxu0 0
    %351 = vmatprep.subr.bf16.mxu0 0
    %352 = vmatpush2.bf16.msra.mxu0 0
    %353 = vmatprep.subr.bf16.mxu0 0
    %354 = vmatpush2.bf16.msra.mxu0 0
    %355 = vmatprep.subr.bf16.mxu0 0
    %356 = vmatpush2.bf16.msra.mxu0 0
    %357 = vmatprep.mubr.bf16.mxu0 0
    %358 = vmatmul.mubr.bf16.gmra.mxu0 %v320
    %v359 = vpop.f32.mrf.mxu0
    %v360 = vadd.f32 0.0, %v359
    %v361 = vpop.f32.mrf.mxu0
    %v362 = vpop.f32.mrf.mxu0
    %v363 = vadd.f32 0.0, %v362
    %v364 = vpop.f32.mrf.mxu0
    %365 = vmatprep.mubr.bf16.mxu0 0
    %366 = vmatmul.mubr.bf16.gmra.mxu0 %v323
    %v367 = vpop.f32.mrf.mxu0
    %v368 = vadd.f32 0.0, %v367
    %v369 = vpop.f32.mrf.mxu0
    %v370 = vpop.f32.mrf.mxu0
    %v371 = vadd.f32 0.0, %v370
    %v372 = vpop.f32.mrf.mxu0
    %373 = vdwg.mxu0
    %v374 = vadd.f32 %v264, %v360
    %v375 = vadd.f32 %v267, %v363
    %v376 = vadd.f32 %v272, %v368
    %v377 = vadd.f32 %v275, %v371
    %378 = vmax.xlane.f32.xlu0 %v374
    %v379 = vpop.xlane.xlu0 %378
    %380 = vmax.xlane.f32.xlu0 %v375
    %v381 = vpop.xlane.xlu0 %380
    %382 = vmax.xlane.f32.xlu0 %v376
    %v383 = vpop.xlane.xlu0 %382
    %384 = vmax.xlane.f32.xlu0 %v377
    %v385 = vpop.xlane.xlu0 %384
    %v386 = vsub.f32 %v374, %v379
    %v387 = vsub.f32 %v375, %v381
    %v388 = vsub.f32 %v376, %v383
    %v389 = vsub.f32 %v377, %v385
    %v390 = vmul.f32 %v386, 1.442695
    %v391 = vpow.pop %v390
    %v392 = vmul.f32 %v387, 1.442695
    %v393 = vpow.pop %v392
    %v394 = vmul.f32 %v388, 1.442695
    %v395 = vpow.pop %v394
    %v396 = vmul.f32 %v389, 1.442695
    %v397 = vpow.pop %v396
    %398 = vadd.xlane.f32.xlu0 %v391
    %v399 = vpop.xlane.xlu0 %398
    %400 = vadd.xlane.f32.xlu0 %v393
    %v401 = vpop.xlane.xlu0 %400
    %402 = vadd.xlane.f32.xlu0 %v395
    %v403 = vpop.xlane.xlu0 %402
    %404 = vadd.xlane.f32.xlu0 %v397
    %v405 = vpop.xlane.xlu0 %404
    %v406 = vrcp.pop %v399
    %v407 = vrcp.pop %v401
    %v408 = vrcp.pop %v403
    %v409 = vrcp.pop %v405
    %v410 = vmul.f32 %v399, %v406
    %v411 = vmul.f32 %v401, %v407
    %v412 = vmul.f32 %v403, %v408
    %v413 = vmul.f32 %v405, %v409
    %v414 = vsub.f32 2.0, %v410
    %v415 = vsub.f32 2.0, %v411
    %v416 = vsub.f32 2.0, %v412
    %v417 = vsub.f32 2.0, %v413
    %v418 = vmul.f32 %v406, %v414
    %v419 = vmul.f32 %v407, %v415
    %v420 = vmul.f32 %v408, %v416
    %v421 = vmul.f32 %v409, %v417
    %v422 = vmul.f32 %v391, %v418
    %v423 = vmul.f32 %v393, %v419
    %v424 = vmul.f32 %v395, %v420
    %v425 = vmul.f32 %v397, %v421
    %426 = vst [vmem:[#allocation8] sm:$0xff] %v422
    %427 = vst [vmem:[#allocation8 + $0x8] sm:$0xff] %v423
    %428 = vst [vmem:[#allocation8 + $0x10] sm:$0xff] %v424
    %429 = vst [vmem:[#allocation8 + $0x18] sm:$0xff] %v425
    // Predicated region
    $region42: #{tpu_custom_call.1} parent=1 // pred_check
      _
    $region43: #{tpu_custom_call.1} parent=1 // pred_check_branch
      %431 = sbr.rel (0) target = $region45
    $region44: #{tpu_custom_call.1} parent=1 // pred_region
      %s433 = ssub.s32 512, 512
      %434 = vsyncadd [#allocation4], %s433
      %s435 = sshll.u32 [#allocation8], 4
      %s436 = int_to_ptr.vmem [resolvable:$true] %s435
      %441 = dma.vmem_to_hbm [thread:$0]  %s436, 512, %s7, [#allocation4], 128, 128, 8
    $region45: #{tpu_custom_call.1} parent=1 // pred_fallthru
      _
    // Predicated region
    $region46: #{tpu_custom_call.1} parent=1 // pred_check
      _
    $region47: #{tpu_custom_call.1} parent=1 // pred_check_branch
      %443 = sbr.rel (0) target = $region49
    $region48: #{tpu_custom_call.1} parent=1 // pred_region
      %444 = dma.done [#allocation4], 512
    $region49: #{tpu_custom_call.1} parent=1 // pred_fallthru
      _
    %445 = vsyncpa [#allocation3], 1
    %446 = vsyncpa [#allocation6], 1
    %447 = vsyncpa [#allocation4], 1

</llo_original>
